<compile_context>
chip_gen: v7x
topology: tpu7x:2x2x1
jax: 0.10.0
libtpu: 0.0.40
codegen_flags: <defaults>
</compile_context>

<pallas_src>
import jax
import jax.numpy as jnp
from jax.experimental import pallas as pl
from jax.experimental.pallas import tpu as pltpu

_LANE = 128
_SUBLANE = 8


def _cdiv(a, b):
    return -(-a // b)


def _round_up(a, b):
    return _cdiv(a, b) * b


def _chip_info():
    """Returns (vmem_capacity_bytes, num_tensorcores) with safe fallbacks."""
    vmem_cap = 64 << 20          # conservative default (v7x per-core VMEM)
    cores = 1
    try:
        info = pltpu.get_tpu_info()
        vmem_cap = int(getattr(info, "vmem_capacity_bytes", vmem_cap))
        for attr in ("num_tensorcores", "tensorcore_count", "num_cores",
                     "core_count"):
            v = getattr(info, attr, None)
            if isinstance(v, int) and v > 0:
                cores = int(v)
                break
        else:
            # Heuristic: 64 MiB per-core VMEM => v7x (2 TensorCores / chip).
            cores = 2 if vmem_cap <= (64 << 20) else 1
    except Exception:
        pass
    return vmem_cap, cores


def _dice_ce_kernel(logits_ref, tgt_ref, inter_ref, denom_ref, bce_ref):
    t_idx = pl.program_id(1)

    @pl.when(t_idx == 0)
    def _():
        inter_ref[...] = jnp.zeros_like(inter_ref)
        denom_ref[...] = jnp.zeros_like(denom_ref)
        bce_ref[...] = jnp.zeros_like(bce_ref)

    # (N, C, R, 128) probabilities; upcast so bf16 inputs also work.
    logit = logits_ref[...].astype(jnp.float32)
    # (N, 1, R, 128) integer labels; remap label 4 -> 3 (as in to_one_hot).
    # Padding uses label -1, which never matches a channel.
    tgt = tgt_ref[...]
    tgt = jnp.where(tgt == 4, jnp.int32(3), tgt)

    # One-hot mask for all channels at once; the broadcast of tgt over the
    # leading C axis is free in this layout (no sublane broadcast).
    ch = jax.lax.broadcasted_iota(jnp.int32, logit.shape, 1)
    t_mask = tgt == ch                                           # (N, C, R, 128)

    # ---- Dice partial sums: reduce rows only; lanes stay resident (128) ----
    inter_ref[...] += jnp.sum(jnp.where(t_mask, logit, 0.0), axis=-2)
    denom_ref[...] += jnp.sum(logit + t_mask.astype(jnp.float32), axis=-2)

    # ---- BCE partial sums: single-log where-select, BCELoss -100 clamp.
    #      The sign flip is hoisted into the wrapper epilogue.
    p_sel = jnp.where(t_mask, logit, 1.0 - logit)
    bce_ref[...] += jnp.sum(jnp.maximum(jnp.log(p_sel), -100.0), axis=-2)


def dice_ce_loss(logits, targets, *, epsilon=1e-5, num_splits=None,
                 vmem_budget_bytes=None):
    """logits: (N, C, D, H, W) probabilities in (0, 1).
    targets: (N, D, H, W) integer labels (label 4 is remapped to 3)."""
    N, C = logits.shape[0], logits.shape[1]
    P = 1
    for s in logits.shape[2:]:
        P *= s

    vmem_cap, cores = _chip_info()
    # Scoped-VMEM request: <= 64 MiB on v5e/v6e (128 MiB physical),
    # ~48 MiB on v7x (64 MiB physical).
    vmem_limit = int(min(64 << 20, (vmem_cap * 3) // 4))
    if vmem_budget_bytes is None:
        vmem_budget_bytes = vmem_limit - (8 << 20)   # headroom for the compiler
    if num_splits is None:
        num_splits = cores

    in_itemsize = jnp.dtype(logits.dtype).itemsize
    tgt_itemsize = 4   # int32 labels
    # TODO(synk): int8/bf16 label stream (v5e HBM saving) not attempted to avoid
    # an int8 (32,128)-packing relayout on the compare path.

    # Bytes per 128-lane row held in VMEM:
    #   2x double-buffered logits block + 2x double-buffered target block
    #   + ~5 block-sized f32 temporaries Mosaic materializes for the
    #     elementwise chain (mask / selects / log / clamp).
    bytes_per_row = _LANE * N * (C * (2 * in_itemsize + 5 * 4)
                                 + 2 * tgt_itemsize)
    cap_rows = max(_SUBLANE,
                   (vmem_budget_bytes // bytes_per_row) // _SUBLANE * _SUBLANE)

    rows = _cdiv(P, _LANE)
    splits = num_splits if rows >= num_splits * _SUBLANE else 1
    rows_per_split = _cdiv(rows, splits)
    tiles_per_split = _cdiv(rows_per_split, cap_rows)
    tp_rows = _round_up(_cdiv(rows_per_split, tiles_per_split), _SUBLANE)
    rows_per_split = tp_rows * tiles_per_split
    rows_pad = rows_per_split * splits
    P_pad = rows_pad * _LANE

    # Free reshapes only -- no transpose of the big tensor; padding (when
    # needed) only touches the tail.
    logits_f = logits.reshape(N, C, P)
    tgt_f = targets.reshape(N, 1, P).astype(jnp.int32)
    if P_pad != P:
        # Neutral padding: logit 0 / label -1 contribute 0 to every sum.
        logits_f = jnp.pad(logits_f, ((0, 0), (0, 0), (0, P_pad - P)))
        tgt_f = jnp.pad(tgt_f, ((0, 0), (0, 0), (0, P_pad - P)),
                        constant_values=-1)
    logits_4d = logits_f.reshape(N, C, rows_pad, _LANE)
    tgt_4d = tgt_f.reshape(N, 1, rows_pad, _LANE)

    def in_map(s, t):
        return (0, 0, s * tiles_per_split + t, 0)

    acc_spec = pl.BlockSpec((None, N, C, _LANE), lambda s, t: (s, 0, 0, 0))
    out_shapes = (
        jax.ShapeDtypeStruct((splits, N, C, _LANE), jnp.float32),  # inter sums
        jax.ShapeDtypeStruct((splits, N, C, _LANE), jnp.float32),  # denom sums
        jax.ShapeDtypeStruct((splits, N, C, _LANE), jnp.float32),  # BCE sums
    )

    cost = pl.CostEstimate(
        flops=int(10 * N * C * P_pad),
        transcendentals=int(N * C * P_pad),
        bytes_accessed=int(N * C * P_pad * in_itemsize
                           + N * P_pad * tgt_itemsize
                           + 3 * splits * N * C * _LANE * 4),
    )

    inter, denom, bce = pl.pallas_call(
        _dice_ce_kernel,
        out_shape=out_shapes,
        grid_spec=pltpu.PrefetchScalarGridSpec(
            num_scalar_prefetch=0,
            grid=(splits, tiles_per_split),
            in_specs=[
                pl.BlockSpec((N, C, tp_rows, _LANE), in_map),
                pl.BlockSpec((N, 1, tp_rows, _LANE), in_map),
            ],
            out_specs=[acc_spec, acc_spec, acc_spec],
        ),
        compiler_params=pltpu.CompilerParams(
            dimension_semantics=("parallel", "arbitrary"),
            vmem_limit_bytes=vmem_limit,
        ),
        cost_estimate=cost,
    )(logits_4d, tgt_4d)

    # --- tiny epilogue on (splits, N, C, 128) partials (negligible XLA work) ---
    inter = jnp.sum(inter, axis=(0, -1))                       # (N, C) full sums
    denom = jnp.sum(denom, axis=(0, -1))
    dice_score = 2.0 * inter / (denom + epsilon)
    dice_loss = jnp.sum(jnp.mean(1.0 - dice_score, axis=0))    # mean N, sum C
    bce_loss = -jnp.sum(bce) / (N * P)                         # per-ch mean, summed
    # TODO(synk): ignore_index channel skipping not implemented (module default None).
    return dice_loss + bce_loss


def _reference_dice_ce(logits, targets, epsilon=1e-5):
    """Pure-JAX reference matching the PyTorch Dice_CE forward."""
    N, C = logits.shape[0], logits.shape[1]
    tgt = jnp.where(targets == 4, 3, targets)
    logit_flat = logits.reshape(N, C, -1).astype(jnp.float32)
    onehot = (tgt.reshape(N, 1, -1) == jnp.arange(C).reshape(1, C, 1)).astype(
        jnp.float32
    )
    inter = jnp.sum(logit_flat * onehot, axis=-1)
    denom = jnp.sum(logit_flat + onehot, axis=-1)
    dice = 2.0 * inter / (denom + epsilon)
    dice_loss = jnp.sum(jnp.mean(1.0 - dice, axis=0))
    log_p = jnp.maximum(jnp.log(logit_flat), -100.0)
    log_1mp = jnp.maximum(jnp.log(1.0 - logit_flat), -100.0)
    bce = -(onehot * log_p + (1.0 - onehot) * log_1mp)
    bce_loss = jnp.sum(jnp.mean(bce, axis=(0, 2)))
    return dice_loss + bce_loss


if __name__ == "__main__":
    # labels = [0, 1, 2, 3] -> C = 4 channels (label 4 in targets remaps to 3).
    key = jax.random.PRNGKey(0)
    k_logits, k_tgt = jax.random.split(key)

    N, C, D, H, W = 2, 4, 4, 16, 16
    # BCELoss expects probabilities in (0, 1): use a sigmoid of random normals.
    logits = jax.nn.sigmoid(
        jax.random.normal(k_logits, (N, C, D, H, W), dtype=jnp.float32)
    )
    # Integer labels 0..4 (include 4 to exercise the 4 -> 3 remap).
    targets = jax.random.randint(k_tgt, (N, D, H, W), 0, 5, dtype=jnp.int32)

    loss = dice_ce_loss(logits, targets, epsilon=1e-5)
    loss = jax.block_until_ready(loss)

    ref = jax.block_until_ready(_reference_dice_ce(logits, targets, epsilon=1e-5))
    assert jnp.allclose(loss, ref, rtol=1e-5, atol=1e-5), (loss, ref)

    print("KERNEL_OK")
</pallas_src>

<mosaic_0001>
module attributes {stable_mosaic.version = 11 : i64} {
  func.func @_dice_ce_kernel(%arg0: i32, %arg1: i32, %arg2: memref<2x4x8x128xf32, #tpu.memory_space<vmem>>, %arg3: memref<2x1x8x128xi32, #tpu.memory_space<vmem>>, %arg4: memref<1x2x4x128xf32, #tpu.memory_space<vmem>>, %arg5: memref<1x2x4x128xf32, #tpu.memory_space<vmem>>, %arg6: memref<1x2x4x128xf32, #tpu.memory_space<vmem>>) attributes {dimension_semantics = [#tpu.dimension_semantics<parallel>, #tpu.dimension_semantics<arbitrary>], iteration_bounds = array<i64: 1, 1>, scalar_prefetch = 0 : i64, scratch_operands = 0 : i64, tpu.core_type = #tpu.core_type<tc>, window_params = [{transform_indices = @transform_0, window_bounds = array<i64: 2, 4, 8, 128>}, {transform_indices = @transform_1, window_bounds = array<i64: 2, 1, 8, 128>}, {transform_indices = @transform_2, window_bounds = array<i64: 1, 2, 4, 128>}, {transform_indices = @transform_3, window_bounds = array<i64: 1, 2, 4, 128>}, {transform_indices = @transform_4, window_bounds = array<i64: 1, 2, 4, 128>}]} {
    %c0_i32 = arith.constant 0 : i32
    %0 = arith.cmpi eq, %arg1, %c0_i32 : i32
    %1 = arith.extui %0 : i1 to i32
    %c0_i32_0 = arith.constant 0 : i32
    %2 = arith.cmpi ne, %1, %c0_i32_0 : i32
    scf.if %2 {
      %cst_37 = arith.constant 0.000000e+00 : f32
      %44 = vector.broadcast %cst_37 : f32 to vector<2x4x128xf32>
      %c0_38 = arith.constant 0 : index
      %c0_39 = arith.constant 0 : index
      %c0_40 = arith.constant 0 : index
      %c0_41 = arith.constant 0 : index
      %45 = vector.load %arg4[%c0_38, %c0_39, %c0_40, %c0_41] : memref<1x2x4x128xf32, #tpu.memory_space<vmem>>, vector<1x2x4x128xf32>
      %46 = vector.shape_cast %45 : vector<1x2x4x128xf32> to vector<2x4x128xf32>
      %47 = vector.shape_cast %44 : vector<2x4x128xf32> to vector<1x2x4x128xf32>
      tpu.vector_store %arg4[%c0_38, %c0_39, %c0_40, %c0_41], %47 {strides = array<i32>} : memref<1x2x4x128xf32, #tpu.memory_space<vmem>>, vector<1x2x4x128xf32>,
      %cst_42 = arith.constant 0.000000e+00 : f32
      %48 = vector.broadcast %cst_42 : f32 to vector<2x4x128xf32>
      %c0_43 = arith.constant 0 : index
      %c0_44 = arith.constant 0 : index
      %c0_45 = arith.constant 0 : index
      %c0_46 = arith.constant 0 : index
      %49 = vector.load %arg5[%c0_43, %c0_44, %c0_45, %c0_46] : memref<1x2x4x128xf32, #tpu.memory_space<vmem>>, vector<1x2x4x128xf32>
      %50 = vector.shape_cast %49 : vector<1x2x4x128xf32> to vector<2x4x128xf32>
      %51 = vector.shape_cast %48 : vector<2x4x128xf32> to vector<1x2x4x128xf32>
      tpu.vector_store %arg5[%c0_43, %c0_44, %c0_45, %c0_46], %51 {strides = array<i32>} : memref<1x2x4x128xf32, #tpu.memory_space<vmem>>, vector<1x2x4x128xf32>,
      %cst_47 = arith.constant 0.000000e+00 : f32
      %52 = vector.broadcast %cst_47 : f32 to vector<2x4x128xf32>
      %c0_48 = arith.constant 0 : index
      %c0_49 = arith.constant 0 : index
      %c0_50 = arith.constant 0 : index
      %c0_51 = arith.constant 0 : index
      %53 = vector.load %arg6[%c0_48, %c0_49, %c0_50, %c0_51] : memref<1x2x4x128xf32, #tpu.memory_space<vmem>>, vector<1x2x4x128xf32>
      %54 = vector.shape_cast %53 : vector<1x2x4x128xf32> to vector<2x4x128xf32>
      %55 = vector.shape_cast %52 : vector<2x4x128xf32> to vector<1x2x4x128xf32>
      tpu.vector_store %arg6[%c0_48, %c0_49, %c0_50, %c0_51], %55 {strides = array<i32>} : memref<1x2x4x128xf32, #tpu.memory_space<vmem>>, vector<1x2x4x128xf32>,
    } else {
    }
    %c0 = arith.constant 0 : index
    %c0_1 = arith.constant 0 : index
    %c0_2 = arith.constant 0 : index
    %c0_3 = arith.constant 0 : index
    %3 = vector.load %arg2[%c0, %c0_1, %c0_2, %c0_3] : memref<2x4x8x128xf32, #tpu.memory_space<vmem>>, vector<2x4x8x128xf32>
    %c0_4 = arith.constant 0 : index
    %c0_5 = arith.constant 0 : index
    %c0_6 = arith.constant 0 : index
    %c0_7 = arith.constant 0 : index
    %4 = vector.load %arg3[%c0_4, %c0_5, %c0_6, %c0_7] : memref<2x1x8x128xi32, #tpu.memory_space<vmem>>, vector<2x1x8x128xi32>
    %c4_i32 = arith.constant 4 : i32
    %5 = vector.broadcast %c4_i32 : i32 to vector<2x1x8x128xi32>
    %6 = arith.cmpi eq, %4, %5 : vector<2x1x8x128xi32>
    %c3_i32 = arith.constant 3 : i32
    %7 = vector.broadcast %c3_i32 : i32 to vector<2x1x8x128xi32>
    %8 = arith.select %6, %7, %4 : vector<2x1x8x128xi1>, vector<2x1x8x128xi32>
    %9 = tpu.iota {dimensions = array<i32: 1>} : vector<2x4x8x128xi32>
    %10 = vector.broadcast %8 : vector<2x1x8x128xi32> to vector<2x4x8x128xi32>
    %11 = arith.cmpi eq, %10, %9 : vector<2x4x8x128xi32>
    %c0_8 = arith.constant 0 : index
    %c0_9 = arith.constant 0 : index
    %c0_10 = arith.constant 0 : index
    %c0_11 = arith.constant 0 : index
    %12 = vector.load %arg4[%c0_8, %c0_9, %c0_10, %c0_11] : memref<1x2x4x128xf32, #tpu.memory_space<vmem>>, vector<1x2x4x128xf32>
    %13 = vector.shape_cast %12 : vector<1x2x4x128xf32> to vector<2x4x128xf32>
    %cst = arith.constant 0.000000e+00 : f32
    %14 = vector.broadcast %cst : f32 to vector<2x4x8x128xf32>
    %15 = arith.select %11, %3, %14 : vector<2x4x8x128xi1>, vector<2x4x8x128xf32>
    %cst_12 = arith.constant dense<0.000000e+00> : vector<2x4x128xf32>
    %16 = vector.multi_reduction <add>, %15, %cst_12 [2] : vector<2x4x8x128xf32> to vector<2x4x128xf32>
    %17 = arith.addf %13, %16 : vector<2x4x128xf32>
    %c0_13 = arith.constant 0 : index
    %c0_14 = arith.constant 0 : index
    %c0_15 = arith.constant 0 : index
    %c0_16 = arith.constant 0 : index
    %18 = vector.load %arg4[%c0_13, %c0_14, %c0_15, %c0_16] : memref<1x2x4x128xf32, #tpu.memory_space<vmem>>, vector<1x2x4x128xf32>
    %19 = vector.shape_cast %18 : vector<1x2x4x128xf32> to vector<2x4x128xf32>
    %20 = vector.shape_cast %17 : vector<2x4x128xf32> to vector<1x2x4x128xf32>
    tpu.vector_store %arg4[%c0_13, %c0_14, %c0_15, %c0_16], %20 {strides = array<i32>} : memref<1x2x4x128xf32, #tpu.memory_space<vmem>>, vector<1x2x4x128xf32>,
    %c0_17 = arith.constant 0 : index
    %c0_18 = arith.constant 0 : index
    %c0_19 = arith.constant 0 : index
    %c0_20 = arith.constant 0 : index
    %21 = vector.load %arg5[%c0_17, %c0_18, %c0_19, %c0_20] : memref<1x2x4x128xf32, #tpu.memory_space<vmem>>, vector<1x2x4x128xf32>
    %22 = vector.shape_cast %21 : vector<1x2x4x128xf32> to vector<2x4x128xf32>
    %23 = arith.extui %11 : vector<2x4x8x128xi1> to vector<2x4x8x128xi32>
    %24 = arith.sitofp %23 : vector<2x4x8x128xi32> to vector<2x4x8x128xf32>
    %25 = arith.addf %3, %24 : vector<2x4x8x128xf32>
    %cst_21 = arith.constant dense<0.000000e+00> : vector<2x4x128xf32>
    %26 = vector.multi_reduction <add>, %25, %cst_21 [2] : vector<2x4x8x128xf32> to vector<2x4x128xf32>
    %27 = arith.addf %22, %26 : vector<2x4x128xf32>
    %c0_22 = arith.constant 0 : index
    %c0_23 = arith.constant 0 : index
    %c0_24 = arith.constant 0 : index
    %c0_25 = arith.constant 0 : index
    %28 = vector.load %arg5[%c0_22, %c0_23, %c0_24, %c0_25] : memref<1x2x4x128xf32, #tpu.memory_space<vmem>>, vector<1x2x4x128xf32>
    %29 = vector.shape_cast %28 : vector<1x2x4x128xf32> to vector<2x4x128xf32>
    %30 = vector.shape_cast %27 : vector<2x4x128xf32> to vector<1x2x4x128xf32>
    tpu.vector_store %arg5[%c0_22, %c0_23, %c0_24, %c0_25], %30 {strides = array<i32>} : memref<1x2x4x128xf32, #tpu.memory_space<vmem>>, vector<1x2x4x128xf32>,
    %cst_26 = arith.constant 1.000000e+00 : f32
    %31 = vector.broadcast %cst_26 : f32 to vector<2x4x8x128xf32>
    %32 = arith.subf %31, %3 : vector<2x4x8x128xf32>
    %33 = arith.select %11, %3, %32 : vector<2x4x8x128xi1>, vector<2x4x8x128xf32>
    %c0_27 = arith.constant 0 : index
    %c0_28 = arith.constant 0 : index
    %c0_29 = arith.constant 0 : index
    %c0_30 = arith.constant 0 : index
    %34 = vector.load %arg6[%c0_27, %c0_28, %c0_29, %c0_30] : memref<1x2x4x128xf32, #tpu.memory_space<vmem>>, vector<1x2x4x128xf32>
    %35 = vector.shape_cast %34 : vector<1x2x4x128xf32> to vector<2x4x128xf32>
    %36 = math.log %33 : vector<2x4x8x128xf32>
    %cst_31 = arith.constant -1.000000e+02 : f32
    %37 = vector.broadcast %cst_31 : f32 to vector<2x4x8x128xf32>
    %38 = arith.maximumf %36, %37 : vector<2x4x8x128xf32>
    %cst_32 = arith.constant dense<0.000000e+00> : vector<2x4x128xf32>
    %39 = vector.multi_reduction <add>, %38, %cst_32 [2] : vector<2x4x8x128xf32> to vector<2x4x128xf32>
    %40 = arith.addf %35, %39 : vector<2x4x128xf32>
    %c0_33 = arith.constant 0 : index
    %c0_34 = arith.constant 0 : index
    %c0_35 = arith.constant 0 : index
    %c0_36 = arith.constant 0 : index
    %41 = vector.load %arg6[%c0_33, %c0_34, %c0_35, %c0_36] : memref<1x2x4x128xf32, #tpu.memory_space<vmem>>, vector<1x2x4x128xf32>
    %42 = vector.shape_cast %41 : vector<1x2x4x128xf32> to vector<2x4x128xf32>
    %43 = vector.shape_cast %40 : vector<2x4x128xf32> to vector<1x2x4x128xf32>
    tpu.vector_store %arg6[%c0_33, %c0_34, %c0_35, %c0_36], %43 {strides = array<i32>} : memref<1x2x4x128xf32, #tpu.memory_space<vmem>>, vector<1x2x4x128xf32>,
    return
  }
  func.func @transform_0(%arg0: i32, %arg1: i32) -> (i32, i32, i32, i32) {
    %c1_i32 = arith.constant 1 : i32
    %0 = arith.muli %arg0, %c1_i32 : i32
    %1 = arith.addi %0, %arg1 : i32
    %c0_i32 = arith.constant 0 : i32
    %c0_i32_0 = arith.constant 0 : i32
    %c0_i32_1 = arith.constant 0 : i32
    %c0_i32_2 = arith.constant 0 : i32
    return %c0_i32, %c0_i32_0, %1, %c0_i32_1 : i32, i32, i32, i32
  }
  func.func @transform_1(%arg0: i32, %arg1: i32) -> (i32, i32, i32, i32) {
    %c1_i32 = arith.constant 1 : i32
    %0 = arith.muli %arg0, %c1_i32 : i32
    %1 = arith.addi %0, %arg1 : i32
    %c0_i32 = arith.constant 0 : i32
    %c0_i32_0 = arith.constant 0 : i32
    %c0_i32_1 = arith.constant 0 : i32
    %c0_i32_2 = arith.constant 0 : i32
    return %c0_i32, %c0_i32_0, %1, %c0_i32_1 : i32, i32, i32, i32
  }
  func.func @transform_2(%arg0: i32, %arg1: i32) -> (i32, i32, i32, i32) {
    %c0_i32 = arith.constant 0 : i32
    %c0_i32_0 = arith.constant 0 : i32
    %c0_i32_1 = arith.constant 0 : i32
    %c0_i32_2 = arith.constant 0 : i32
    return %arg0, %c0_i32, %c0_i32_0, %c0_i32_1 : i32, i32, i32, i32
  }
  func.func @transform_3(%arg0: i32, %arg1: i32) -> (i32, i32, i32, i32) {
    %c0_i32 = arith.constant 0 : i32
    %c0_i32_0 = arith.constant 0 : i32
    %c0_i32_1 = arith.constant 0 : i32
    %c0_i32_2 = arith.constant 0 : i32
    return %arg0, %c0_i32, %c0_i32_0, %c0_i32_1 : i32, i32, i32, i32
  }
  func.func @transform_4(%arg0: i32, %arg1: i32) -> (i32, i32, i32, i32) {
    %c0_i32 = arith.constant 0 : i32
    %c0_i32_0 = arith.constant 0 : i32
    %c0_i32_1 = arith.constant 0 : i32
    %c0_i32_2 = arith.constant 0 : i32
    return %arg0, %c0_i32, %c0_i32_0, %c0_i32_1 : i32, i32, i32, i32
  }
}

</mosaic_0001>

<llo_original>
// kernel: tpu_custom_call.1
$region0: #{tpu_custom_call.1}
  #allocation0 [shape = 'u32[]', space=smem, size = 0x4, offset = 0x4, fixed_abs, tag = 'smem constant byte address 0x4 - core index']
  #allocation1 [shape = 'u32[144,128]{1,0:T(1,128)}', space=vmem, size = 0x12000, scoped, tag = 'internal scratch']
  %s0 = inlined_call_operand.hbm [shape: f32[2,4,8,128], index: 0, kind: input, shape index: {}]
  %s1 = inlined_call_operand.hbm [shape: s32[2,1,8,128], index: 1, kind: input, shape index: {}]
  %s2 = inlined_call_operand.hbm [shape: f32[1,2,4,128], index: 2, kind: output, shape index: {0}]
  %s3 = inlined_call_operand.hbm [shape: f32[1,2,4,128], index: 3, kind: output, shape index: {1}]
  %s4 = inlined_call_operand.hbm [shape: f32[1,2,4,128], index: 4, kind: output, shape index: {2}]
  %5 = xla_tuple %s2, %s3, %s4
  %s6 = sld [smem:[#allocation0]]
  $region46: #{tpu_custom_call.1} parent=0
    _
  %s8 = ssub.s32 1, %s6
  %s9 = scalar_select 0, %s8, %s6
  $region1: #{tpu_custom_call.1} parent=0
    #allocation2 [shape = 'u8[32768]{0}', space=vmem, size = 0x8000, scoped, tag = 'input window, operand 0, single buffered']
    #allocation3 [shape = 's32[1]{0}', space=sflag, size = 0x4, scoped, tag = 'scoped memory for tpu_custom_call.1']
    #allocation4 [shape = 's32[1]{0}', space=sflag, size = 0x4, scoped, tag = 'scoped memory for tpu_custom_call.1']
    #allocation5 [shape = 'u8[8192]{0}', space=vmem, size = 0x2000, scoped, tag = 'input window, operand 1, single buffered']
    #allocation6 [shape = 's32[1]{0}', space=sflag, size = 0x4, scoped, tag = 'scoped memory for tpu_custom_call.1']
    #allocation7 [shape = 'u8[4096]{0}', space=vmem, size = 0x1000, scoped, tag = 'output window, operand 0, single buffered']
    #allocation8 [shape = 'u8[4096]{0}', space=vmem, size = 0x1000, scoped, tag = 'output window, operand 1, single buffered']
    #allocation9 [shape = 's32[1]{0}', space=sflag, size = 0x4, scoped, tag = 'scoped memory for tpu_custom_call.1']
    #allocation10 [shape = 'u8[4096]{0}', space=vmem, size = 0x1000, scoped, tag = 'output window, operand 2, single buffered']
    %10 = vsyncpa [#allocation3], 0
    %11 = vsyncpa [#allocation6], 0
    %12 = vsyncpa [#allocation4], 0
    %13 = vsyncpa [#allocation9], 0
    // Predicated region
    $region2: #{tpu_custom_call.1} parent=1 // pred_check
      _
    $region3: #{tpu_custom_call.1} parent=1 // pred_check_branch
      %15 = sbr.rel (0) target = $region5
    $region4: #{tpu_custom_call.1} parent=1 // pred_region
      %s16 = sadd.s32 0, 0
      %s18 = ssub.s32 1024, 1024
      %19 = vsyncadd [#allocation3], %s18
      %s20 = smul.addr %s16, 128
      %s21 = scalar_lea.hbm %s0, %s20
      %s22 = sshll.u32 [#allocation2], 4
      %s23 = int_to_ptr.vmem [resolvable:$true] %s22
      %28 = dma.hbm_to_vmem [thread:$0]  %s21, 1024, %s23, [#allocation3], 128, 128, 8
    $region5: #{tpu_custom_call.1} parent=1 // pred_fallthru
      _
    // Predicated region
    $region6: #{tpu_custom_call.1} parent=1 // pred_check
      _
    $region7: #{tpu_custom_call.1} parent=1 // pred_check_branch
      %30 = sbr.rel (0) target = $region9
    $region8: #{tpu_custom_call.1} parent=1 // pred_region
      %s31 = sadd.s32 0, 0
      %s33 = ssub.s32 256, 256
      %34 = vsyncadd [#allocation6], %s33
      %s35 = smul.addr %s31, 128
      %s36 = scalar_lea.hbm %s1, %s35
      %s37 = sshll.u32 [#allocation5], 4
      %s38 = int_to_ptr.vmem [resolvable:$true] %s37
      %43 = dma.hbm_to_vmem [thread:$0]  %s36, 256, %s38, [#allocation6], 128, 128, 8
    $region9: #{tpu_custom_call.1} parent=1 // pred_fallthru
      _
    // Predicated region
    $region10: #{tpu_custom_call.1} parent=1 // pred_check
      _
    $region11: #{tpu_custom_call.1} parent=1 // pred_check_branch
      %45 = sbr.rel (0) target = $region13
    $region12: #{tpu_custom_call.1} parent=1 // pred_region
      %46 = dma.done [#allocation3], 1024
    $region13: #{tpu_custom_call.1} parent=1 // pred_fallthru
      _
    // Predicated region
    $region14: #{tpu_custom_call.1} parent=1 // pred_check
      _
    $region15: #{tpu_custom_call.1} parent=1 // pred_check_branch
      %48 = sbr.rel (0) target = $region17
    $region16: #{tpu_custom_call.1} parent=1 // pred_region
      %49 = dma.done [#allocation6], 256
    $region17: #{tpu_custom_call.1} parent=1 // pred_fallthru
      _
    %s50 = sadd.s32 0, 0
    %s51 = sadd.s32 0, 0
    %p52 = scmp.eq.s32.totalorder 0, 0
    // Predicated region
    $region18: #{tpu_custom_call.1} parent=1 // pred_check
      %p53 = pneg %p52
    $region19: #{tpu_custom_call.1} parent=1 // pred_check_branch
      %55 = sbr.rel (%p53) target = $region21
    $region20: #{tpu_custom_call.1} parent=1 // pred_region
      %56 = vst [vmem:[#allocation7] sm:$0xf] 0.0
      %57 = vst [vmem:[#allocation7 + $0x4] sm:$0xf] 0.0
      %58 = vst [vmem:[#allocation8] sm:$0xf] 0.0
      %59 = vst [vmem:[#allocation8 + $0x4] sm:$0xf] 0.0
      %60 = vst [vmem:[#allocation10] sm:$0xf] 0.0
      %61 = vst [vmem:[#allocation10 + $0x4] sm:$0xf] 0.0
    $region21: #{tpu_custom_call.1} parent=1 // pred_fallthru
      _
    %v62 = vld [vmem:[#allocation2] sm:$0xff]
    %v63 = vld [vmem:[#allocation2 + $0x8] sm:$0xff]
    %v64 = vld [vmem:[#allocation2 + $0x10] sm:$0xff]
    %v65 = vld [vmem:[#allocation2 + $0x18] sm:$0xff]
    %v66 = vld [vmem:[#allocation2 + $0x20] sm:$0xff]
    %v67 = vld [vmem:[#allocation2 + $0x28] sm:$0xff]
    %v68 = vld [vmem:[#allocation2 + $0x30] sm:$0xff]
    %v69 = vld [vmem:[#allocation2 + $0x38] sm:$0xff]
    %v70 = vld [vmem:[#allocation5] sm:$0xff]
    %v71 = vld [vmem:[#allocation5 + $0x8] sm:$0xff]
    %vm72 = vcmp.eq.s32.totalorder %v70, 4
    %vm73 = vcmp.eq.s32.totalorder %v71, 4
    %v74 = vsel %vm72, 3, %v70
    %v75 = vsel %vm73, 3, %v71
    %vm76 = vcmp.eq.s32.totalorder %v74, 0
    %vm77 = vcmp.eq.s32.totalorder %v74, 1
    %vm78 = vcmp.eq.s32.totalorder %v74, 2
    %vm79 = vcmp.eq.s32.totalorder %v74, 3
    %vm80 = vcmp.eq.s32.totalorder %v75, 0
    %vm81 = vcmp.eq.s32.totalorder %v75, 1
    %vm82 = vcmp.eq.s32.totalorder %v75, 2
    %vm83 = vcmp.eq.s32.totalorder %v75, 3
    %v84 = vld [vmem:[#allocation7] sm:$0xf]
    %v85 = vld [vmem:[#allocation7 + $0x4] sm:$0xf]
    %v86 = vsel %vm76, %v62, 0.0
    %v87 = vsel %vm77, %v63, 0.0
    %v88 = vsel %vm78, %v64, 0.0
    %v89 = vsel %vm79, %v65, 0.0
    %v90 = vsel %vm80, %v66, 0.0
    %v91 = vsel %vm81, %v67, 0.0
    %v92 = vsel %vm82, %v68, 0.0
    %v93 = vsel %vm83, %v69, 0.0
    %v94 = vrot.slane %v86, 4
    %v95 = vadd.f32 %v86, %v94
    %v96 = vrot.slane %v95, 2
    %v97 = vadd.f32 %v95, %v96
    %v98 = vrot.slane %v97, 1
    %v99 = vadd.f32 %v97, %v98
    %v100 = vrot.slane %v87, 4
    %v101 = vadd.f32 %v87, %v100
    %v102 = vrot.slane %v101, 2
    %v103 = vadd.f32 %v101, %v102
    %v104 = vrot.slane %v103, 1
    %v105 = vadd.f32 %v103, %v104
    %v106 = vrot.slane %v88, 4
    %v107 = vadd.f32 %v88, %v106
    %v108 = vrot.slane %v107, 2
    %v109 = vadd.f32 %v107, %v108
    %v110 = vrot.slane %v109, 1
    %v111 = vadd.f32 %v109, %v110
    %v112 = vrot.slane %v89, 4
    %v113 = vadd.f32 %v89, %v112
    %v114 = vrot.slane %v113, 2
    %v115 = vadd.f32 %v113, %v114
    %v116 = vrot.slane %v115, 1
    %v117 = vadd.f32 %v115, %v116
    %v118 = vrot.slane %v90, 4
    %v119 = vadd.f32 %v90, %v118
    %v120 = vrot.slane %v119, 2
    %v121 = vadd.f32 %v119, %v120
    %v122 = vrot.slane %v121, 1
    %v123 = vadd.f32 %v121, %v122
    %v124 = vrot.slane %v91, 4
    %v125 = vadd.f32 %v91, %v124
    %v126 = vrot.slane %v125, 2
    %v127 = vadd.f32 %v125, %v126
    %v128 = vrot.slane %v127, 1
    %v129 = vadd.f32 %v127, %v128
    %v130 = vrot.slane %v92, 4
    %v131 = vadd.f32 %v92, %v130
    %v132 = vrot.slane %v131, 2
    %v133 = vadd.f32 %v131, %v132
    %v134 = vrot.slane %v133, 1
    %v135 = vadd.f32 %v133, %v134
    %v136 = vrot.slane %v93, 4
    %v137 = vadd.f32 %v93, %v136
    %v138 = vrot.slane %v137, 2
    %v139 = vadd.f32 %v137, %v138
    %v140 = vrot.slane %v139, 1
    %v141 = vadd.f32 %v139, %v140
    %vm150 = vcmask 1041409
    %v151 = vsel %vm150, %v105, %v99
    %vm152 = vcmask 1042434
    %v153 = vsel %vm152, %v111, %v151
    %vm154 = vcmask 1043459
    %v155 = vsel %vm154, %v117, %v153
    %v156 = vsel %vm150, %v129, %v123
    %v157 = vsel %vm152, %v135, %v156
    %v158 = vsel %vm154, %v141, %v157
    %v161 = vadd.f32 %v84, %v155
    %v162 = vadd.f32 %v85, %v158
    %163 = vst [vmem:[#allocation7] sm:$0xf] %v161
    %164 = vst [vmem:[#allocation7 + $0x4] sm:$0xf] %v162
    %v165 = vld [vmem:[#allocation8] sm:$0xf]
    %v166 = vld [vmem:[#allocation8 + $0x4] sm:$0xf]
    %v167 = vsel %vm76, 1, 0
    %v168 = vsel %vm77, 1, 0
    %v169 = vsel %vm78, 1, 0
    %v170 = vsel %vm79, 1, 0
    %v171 = vsel %vm80, 1, 0
    %v172 = vsel %vm81, 1, 0
    %v173 = vsel %vm82, 1, 0
    %v174 = vsel %vm83, 1, 0
    %v175 = vcvt.s32.f32 %v167
    %v176 = vcvt.s32.f32 %v168
    %v177 = vcvt.s32.f32 %v169
    %v178 = vcvt.s32.f32 %v170
    %v179 = vcvt.s32.f32 %v171
    %v180 = vcvt.s32.f32 %v172
    %v181 = vcvt.s32.f32 %v173
    %v182 = vcvt.s32.f32 %v174
    %v183 = vadd.f32 %v62, %v175
    %v184 = vadd.f32 %v63, %v176
    %v185 = vadd.f32 %v64, %v177
    %v186 = vadd.f32 %v65, %v178
    %v187 = vadd.f32 %v66, %v179
    %v188 = vadd.f32 %v67, %v180
    %v189 = vadd.f32 %v68, %v181
    %v190 = vadd.f32 %v69, %v182
    %v191 = vrot.slane %v183, 4
    %v192 = vadd.f32 %v183, %v191
    %v193 = vrot.slane %v192, 2
    %v194 = vadd.f32 %v192, %v193
    %v195 = vrot.slane %v194, 1
    %v196 = vadd.f32 %v194, %v195
    %v197 = vrot.slane %v184, 4
    %v198 = vadd.f32 %v184, %v197
    %v199 = vrot.slane %v198, 2
    %v200 = vadd.f32 %v198, %v199
    %v201 = vrot.slane %v200, 1
    %v202 = vadd.f32 %v200, %v201
    %v203 = vrot.slane %v185, 4
    %v204 = vadd.f32 %v185, %v203
    %v205 = vrot.slane %v204, 2
    %v206 = vadd.f32 %v204, %v205
    %v207 = vrot.slane %v206, 1
    %v208 = vadd.f32 %v206, %v207
    %v209 = vrot.slane %v186, 4
    %v210 = vadd.f32 %v186, %v209
    %v211 = vrot.slane %v210, 2
    %v212 = vadd.f32 %v210, %v211
    %v213 = vrot.slane %v212, 1
    %v214 = vadd.f32 %v212, %v213
    %v215 = vrot.slane %v187, 4
    %v216 = vadd.f32 %v187, %v215
    %v217 = vrot.slane %v216, 2
    %v218 = vadd.f32 %v216, %v217
    %v219 = vrot.slane %v218, 1
    %v220 = vadd.f32 %v218, %v219
    %v221 = vrot.slane %v188, 4
    %v222 = vadd.f32 %v188, %v221
    %v223 = vrot.slane %v222, 2
    %v224 = vadd.f32 %v222, %v223
    %v225 = vrot.slane %v224, 1
    %v226 = vadd.f32 %v224, %v225
    %v227 = vrot.slane %v189, 4
    %v228 = vadd.f32 %v189, %v227
    %v229 = vrot.slane %v228, 2
    %v230 = vadd.f32 %v228, %v229
    %v231 = vrot.slane %v230, 1
    %v232 = vadd.f32 %v230, %v231
    %v233 = vrot.slane %v190, 4
    %v234 = vadd.f32 %v190, %v233
    %v235 = vrot.slane %v234, 2
    %v236 = vadd.f32 %v234, %v235
    %v237 = vrot.slane %v236, 1
    %v238 = vadd.f32 %v236, %v237
    %v247 = vsel %vm150, %v202, %v196
    %v248 = vsel %vm152, %v208, %v247
    %v249 = vsel %vm154, %v214, %v248
    %v250 = vsel %vm150, %v226, %v220
    %v251 = vsel %vm152, %v232, %v250
    %v252 = vsel %vm154, %v238, %v251
    %v255 = vadd.f32 %v165, %v249
    %v256 = vadd.f32 %v166, %v252
    %257 = vst [vmem:[#allocation8] sm:$0xf] %v255
    %258 = vst [vmem:[#allocation8 + $0x4] sm:$0xf] %v256
    %v259 = vsub.f32 1.0, %v62
    %v260 = vsub.f32 1.0, %v63
    %v261 = vsub.f32 1.0, %v64
    %v262 = vsub.f32 1.0, %v65
    %v263 = vsub.f32 1.0, %v66
    %v264 = vsub.f32 1.0, %v67
    %v265 = vsub.f32 1.0, %v68
    %v266 = vsub.f32 1.0, %v69
    %v267 = vsel %vm76, %v62, %v259
    %v268 = vsel %vm77, %v63, %v260
    %v269 = vsel %vm78, %v64, %v261
    %v270 = vsel %vm79, %v65, %v262
    %v271 = vsel %vm80, %v66, %v263
    %v272 = vsel %vm81, %v67, %v264
    %v273 = vsel %vm82, %v68, %v265
    %v274 = vsel %vm83, %v69, %v266
    %v275 = vld [vmem:[#allocation10] sm:$0xf]
    %v276 = vld [vmem:[#allocation10 + $0x4] sm:$0xf]
    %v277 = vlog2.pop %v267
    %v278 = vmul.f32 %v277, 0.6931472
    %v279 = vlog2.pop %v268
    %v280 = vmul.f32 %v279, 0.6931472
    %v281 = vlog2.pop %v269
    %v282 = vmul.f32 %v281, 0.6931472
    %v283 = vlog2.pop %v270
    %v284 = vmul.f32 %v283, 0.6931472
    %v285 = vlog2.pop %v271
    %v286 = vmul.f32 %v285, 0.6931472
    %v287 = vlog2.pop %v272
    %v288 = vmul.f32 %v287, 0.6931472
    %v289 = vlog2.pop %v273
    %v290 = vmul.f32 %v289, 0.6931472
    %v291 = vlog2.pop %v274
    %v292 = vmul.f32 %v291, 0.6931472
    %v293 = vmax.f32 %v278, -100.0
    %v294 = vmax.f32 %v280, -100.0
    %v295 = vmax.f32 %v282, -100.0
    %v296 = vmax.f32 %v284, -100.0
    %v297 = vmax.f32 %v286, -100.0
    %v298 = vmax.f32 %v288, -100.0
    %v299 = vmax.f32 %v290, -100.0
    %v300 = vmax.f32 %v292, -100.0
    %v301 = vrot.slane %v293, 4
    %v302 = vadd.f32 %v293, %v301
    %v303 = vrot.slane %v302, 2
    %v304 = vadd.f32 %v302, %v303
    %v305 = vrot.slane %v304, 1
    %v306 = vadd.f32 %v304, %v305
    %v307 = vrot.slane %v294, 4
    %v308 = vadd.f32 %v294, %v307
    %v309 = vrot.slane %v308, 2
    %v310 = vadd.f32 %v308, %v309
    %v311 = vrot.slane %v310, 1
    %v312 = vadd.f32 %v310, %v311
    %v313 = vrot.slane %v295, 4
    %v314 = vadd.f32 %v295, %v313
    %v315 = vrot.slane %v314, 2
    %v316 = vadd.f32 %v314, %v315
    %v317 = vrot.slane %v316, 1
    %v318 = vadd.f32 %v316, %v317
    %v319 = vrot.slane %v296, 4
    %v320 = vadd.f32 %v296, %v319
    %v321 = vrot.slane %v320, 2
    %v322 = vadd.f32 %v320, %v321
    %v323 = vrot.slane %v322, 1
    %v324 = vadd.f32 %v322, %v323
    %v325 = vrot.slane %v297, 4
    %v326 = vadd.f32 %v297, %v325
    %v327 = vrot.slane %v326, 2
    %v328 = vadd.f32 %v326, %v327
    %v329 = vrot.slane %v328, 1
    %v330 = vadd.f32 %v328, %v329
    %v331 = vrot.slane %v298, 4
    %v332 = vadd.f32 %v298, %v331
    %v333 = vrot.slane %v332, 2
    %v334 = vadd.f32 %v332, %v333
    %v335 = vrot.slane %v334, 1
    %v336 = vadd.f32 %v334, %v335
    %v337 = vrot.slane %v299, 4
    %v338 = vadd.f32 %v299, %v337
    %v339 = vrot.slane %v338, 2
    %v340 = vadd.f32 %v338, %v339
    %v341 = vrot.slane %v340, 1
    %v342 = vadd.f32 %v340, %v341
    %v343 = vrot.slane %v300, 4
    %v344 = vadd.f32 %v300, %v343
    %v345 = vrot.slane %v344, 2
    %v346 = vadd.f32 %v344, %v345
    %v347 = vrot.slane %v346, 1
    %v348 = vadd.f32 %v346, %v347
    %v357 = vsel %vm150, %v312, %v306
    %v358 = vsel %vm152, %v318, %v357
    %v359 = vsel %vm154, %v324, %v358
    %v360 = vsel %vm150, %v336, %v330
    %v361 = vsel %vm152, %v342, %v360
    %v362 = vsel %vm154, %v348, %v361
    %v365 = vadd.f32 %v275, %v359
    %v366 = vadd.f32 %v276, %v362
    %367 = vst [vmem:[#allocation10] sm:$0xf] %v365
    %368 = vst [vmem:[#allocation10 + $0x4] sm:$0xf] %v366
    // Predicated region
    $region22: #{tpu_custom_call.1} parent=1 // pred_check
      _
    $region23: #{tpu_custom_call.1} parent=1 // pred_check_branch
      %370 = sbr.rel (0) target = $region25
    $region24: #{tpu_custom_call.1} parent=1 // pred_region
      %s372 = ssub.s32 128, 128
      %373 = vsyncadd [#allocation4], %s372
      %s374 = sshll.u32 [#allocation7], 4
      %s375 = int_to_ptr.vmem [resolvable:$true] %s374
      %380 = dma.vmem_to_hbm [thread:$0]  %s375, 128, %s2, [#allocation4], 64, 64, 4
    $region25: #{tpu_custom_call.1} parent=1 // pred_fallthru
      _
    // Predicated region
    $region26: #{tpu_custom_call.1} parent=1 // pred_check
      _
    $region27: #{tpu_custom_call.1} parent=1 // pred_check_branch
      %382 = sbr.rel (0) target = $region29
    $region28: #{tpu_custom_call.1} parent=1 // pred_region
      %s384 = ssub.s32 128, 128
      %385 = vsyncadd [#allocation9], %s384
      %s386 = sshll.u32 [#allocation8], 4
      %s387 = int_to_ptr.vmem [resolvable:$true] %s386
      %392 = dma.vmem_to_hbm [thread:$0]  %s387, 128, %s3, [#allocation9], 64, 64, 4
    $region29: #{tpu_custom_call.1} parent=1 // pred_fallthru
      _
    // Predicated region
    $region30: #{tpu_custom_call.1} parent=1 // pred_check
      _
    $region31: #{tpu_custom_call.1} parent=1 // pred_check_branch
      %394 = sbr.rel (0) target = $region33
    $region32: #{tpu_custom_call.1} parent=1 // pred_region
      %s396 = ssub.s32 128, 128
      %397 = vsyncadd [#allocation9], %s396
      %s398 = sshll.u32 [#allocation10], 4
      %s399 = int_to_ptr.vmem [resolvable:$true] %s398
      %404 = dma.vmem_to_hbm [thread:$0]  %s399, 128, %s4, [#allocation9], 64, 64, 4
    $region33: #{tpu_custom_call.1} parent=1 // pred_fallthru
      _
    // Predicated region
    $region34: #{tpu_custom_call.1} parent=1 // pred_check
      _
    $region35: #{tpu_custom_call.1} parent=1 // pred_check_branch
      %406 = sbr.rel (0) target = $region37
    $region36: #{tpu_custom_call.1} parent=1 // pred_region
      %407 = dma.done [#allocation4], 128
    $region37: #{tpu_custom_call.1} parent=1 // pred_fallthru
      _
    // Predicated region
    $region38: #{tpu_custom_call.1} parent=1 // pred_check
      _
    $region39: #{tpu_custom_call.1} parent=1 // pred_check_branch
      %409 = sbr.rel (0) target = $region41
    $region40: #{tpu_custom_call.1} parent=1 // pred_region
      %410 = dma.done [#allocation9], 128
    $region41: #{tpu_custom_call.1} parent=1 // pred_fallthru
      _
    // Predicated region
    $region42: #{tpu_custom_call.1} parent=1 // pred_check
      _
    $region43: #{tpu_custom_call.1} parent=1 // pred_check_branch
      %412 = sbr.rel (0) target = $region45
    $region44: #{tpu_custom_call.1} parent=1 // pred_region
      %413 = dma.done [#allocation9], 128
    $region45: #{tpu_custom_call.1} parent=1 // pred_fallthru
      _
    %414 = vsyncpa [#allocation3], 1
    %415 = vsyncpa [#allocation6], 1
    %416 = vsyncpa [#allocation4], 1
    %417 = vsyncpa [#allocation9], 1

</llo_original>
